<compile_context>
chip_gen: v7x
topology: tpu7x:2x2x1
jax: 0.10.0
libtpu: 0.0.40
codegen_flags: <defaults>
</compile_context>

<pallas_src>
import numpy as np
import jax
import jax.numpy as jnp
from jax.experimental import pallas as pl
from jax.experimental.pallas import tpu as pltpu  # noqa: F401  (TPU backend)


# ----------------------------------------------------------------------------
# Pallas kernel: full At operator for all (batch, coil) at once.
#   k_ref  : [2R, N]      stacked masked k-space (N = batch*ncoil*ncol)
#   cs_ref : [2R, N]      stacked csm
#   a_ref  : [2R, 2R]     block-complex row-iDFT (fftshift + row flip folded)
#   bd_ref : [N, 2N]      [kron(I, Bc_re) | kron(I, Bc_im)] (col flip folded)
#   ss_ref : [N, 2W]      [S_re | S_im]  coil-sum + re/im packing (0/1 matrix)
#   o_ref  : [R, W]       W = 2*batch*ncol  (lane-dense output block)
# ----------------------------------------------------------------------------
def _at_kernel(k_ref, cs_ref, a_ref, bd_ref, ss_ref, o_ref):
    R = k_ref.shape[0] // 2
    N = k_ref.shape[1]
    W = o_ref.shape[1]

    # Row iDFT (+fftshift_row, +row sign) as one block-complex matmul.
    T = jnp.dot(a_ref[...], k_ref[...],
                preferred_element_type=jnp.float32)          # [2R, N]
    t_re = T[:R, :]
    t_im = T[R:, :]

    # Column iDFT (+col sign), batched over (batch, coil) via block-diagonal.
    bd_re = bd_ref[:, 0:N]
    bd_im = bd_ref[:, N:2 * N]
    img_re = (jnp.dot(t_re, bd_re, preferred_element_type=jnp.float32)
              - jnp.dot(t_im, bd_im, preferred_element_type=jnp.float32))
    img_im = (jnp.dot(t_re, bd_im, preferred_element_type=jnp.float32)
              + jnp.dot(t_im, bd_re, preferred_element_type=jnp.float32))

    # img * conj(csm), elementwise.
    cs_re = cs_ref[:R, :]
    cs_im = cs_ref[R:, :]
    o_re = img_re * cs_re + img_im * cs_im                   # [R, N]
    o_im = img_im * cs_re - img_re * cs_im                   # [R, N]

    # Coil sum + re/im packing as a 0/1 matmul -> lane-dense [R, W] output.
    s_re = ss_ref[:, 0:W]
    s_im = ss_ref[:, W:2 * W]
    o_ref[...] = (jnp.dot(o_re, s_re, preferred_element_type=jnp.float32)
                  + jnp.dot(o_im, s_im, preferred_element_type=jnp.float32))


def at_pallas(kstk, cstk, a_blk, bd, ss, nrow, out_cols):
    return pl.pallas_call(
        _at_kernel,
        out_shape=jax.ShapeDtypeStruct((nrow, out_cols), jnp.float32),
    )(kstk, cstk, a_blk, bd, ss)


# ----------------------------------------------------------------------------
# JAX-side module mirroring DC_ST_Pmask.__init__/generateMask/forward
# ----------------------------------------------------------------------------
class DCSTPmaskPallas:
    def __init__(self, key, ncoil=4, nrow=32, ncol=32, slope=0.25,
                 samplingRatio=0.1):
        self.ncoil = ncoil
        self.nrow = nrow
        self.ncol = ncol
        self.slope = slope
        self.samplingRatio = samplingRatio

        k1, k2 = jax.random.split(key)
        w1 = (jax.random.uniform(k1, (nrow,), dtype=jnp.float32) - 0.5) * 30.0
        w2 = (jax.random.uniform(k2, (ncol,), dtype=jnp.float32) - 0.5) * 30.0
        w1 = w1.at[nrow // 2 - 13: nrow // 2 + 12].set(15.0)
        w2 = w2.at[ncol // 2 - 13: ncol // 2 + 12].set(15.0)
        self.weight_parameters1 = w1
        self.weight_parameters2 = w2

        # lambda_dll2 (flag_solver==0 branch) -- kept for completeness.
        self.lambda_dll2 = jnp.ones((1,), jnp.float32) * 0.01

        # Precompute (f64) the inverse-DFT matrices with fftshift_row and the
        # (-1)^(r+c) checkerboard folded in.
        r = np.arange(nrow)
        c = np.arange(ncol)
        sr = np.where(r % 2 == 0, -1.0, 1.0)
        sc = np.where(c % 2 == 0, -1.0, 1.0)
        Wr = np.exp(2j * np.pi * np.outer(r, r) / nrow) / nrow
        Wr = np.roll(Wr, nrow // 2, axis=0)          # folds fft_shift_row
        A = sr[:, None] * Wr                         # folds row sign
        Wc = np.exp(2j * np.pi * np.outer(c, c) / ncol) / ncol
        Bc = Wc.T * sc[None, :]                      # right-mult matrix, col sign
        self._A_blk = jnp.asarray(
            np.block([[A.real, -A.imag], [A.imag, A.real]]), jnp.float32)
        self._Bc_re = Bc.real.astype(np.float32)
        self._Bc_im = Bc.imag.astype(np.float32)
        self._const_cache = {}

    # Batched (block-diagonal) column-iDFT matrix and the coil-sum/packing
    # matrix depend on (batch, ncoil); built once per shape and cached.
    def _batched_consts(self, batch):
        key = (batch, self.ncoil)
        if key not in self._const_cache:
            C = self.ncol
            BN = batch * self.ncoil
            BDre = np.kron(np.eye(BN, dtype=np.float32), self._Bc_re)
            BDim = np.kron(np.eye(BN, dtype=np.float32), self._Bc_im)
            BD = np.concatenate([BDre, BDim], axis=1)        # [BN*C, 2*BN*C]

            N = BN * C
            W = 2 * batch * C
            L = np.arange(N)
            j = (L // (self.ncoil * C)) * C + (L % C)        # b*C + c
            S_re = np.zeros((N, W), np.float32)
            S_im = np.zeros((N, W), np.float32)
            S_re[L, j] = 1.0                                 # real half of out
            S_im[L, batch * C + j] = 1.0                     # imag half of out
            SS = np.concatenate([S_re, S_im], axis=1)        # [N, 2W]

            self._const_cache[key] = (jnp.asarray(BD), jnp.asarray(SS))
        return self._const_cache[key]

    def generateMask(self, key):
        # flag_ND == 2, passSigmoid=False, rescale=False, stochasticSampling=True
        p1 = 1.0 / (1.0 + jnp.exp(-self.slope * self.weight_parameters1))
        p2 = 1.0 / (1.0 + jnp.exp(-self.slope * self.weight_parameters2))
        self.Pmask = p1[:, None] + p2[None, :]
        k1, k2 = jax.random.split(key)
        m1 = jax.random.bernoulli(k1, p1).astype(jnp.float32)   # [nrow]
        m2 = jax.random.bernoulli(k2, p2).astype(jnp.float32)   # [ncol]
        Mask1 = jnp.broadcast_to(m1[:, None], (self.nrow, self.ncol))
        Mask2 = jnp.broadcast_to(m2[None, :], (self.nrow, self.ncol))
        self.Mask = Mask1 * Mask2
        return self.Mask

    def forward(self, kdata, csms, key):
        R, C = self.nrow, self.ncol
        B, ncoil = kdata.shape[0], kdata.shape[1]

        mask = self.generateMask(key)
        # fully-sampled calibration center
        mask = mask.at[R // 2 - 13: R // 2 + 12,
                       C // 2 - 13: C // 2 + 12].set(1.0)
        self.masks = mask

        # One fused transpose each (mask multiply fused into the kdata one):
        #   [B, ncoil, R, C, 2] -> [2R, B*ncoil*C]  rows=(re|im, r), lanes=(b,coil,c)
        km = kdata.astype(jnp.float32) * mask[None, None, :, :, None]
        kstk = jnp.transpose(km, (4, 2, 0, 1, 3)).reshape(2 * R, B * ncoil * C)
        cstk = jnp.transpose(csms.astype(jnp.float32),
                             (4, 2, 0, 1, 3)).reshape(2 * R, B * ncoil * C)

        BD, SS = self._batched_consts(B)

        out = at_pallas(kstk, cstk, self._A_blk, BD, SS, R, 2 * B * C)

        # [R, (re|im, b, c)] -> [B, 2, R, C]
        x = out.reshape(R, 2, B, C).transpose(2, 1, 0, 3)
        x_start = x

        # flag_precond == 0  ->  precond = 0
        # TODO(synk): flag_solver==0 branch (ResBlock2 + Back_forward + DC_layer
        # CG iterations) relies on external modules not defined in the reference
        # source; the zero-filled adjoint recon x_start is returned as Xs.
        Xs = [x_start]
        return Xs


# ----------------------------------------------------------------------------
# Pure-JAX reference of the At operator (correctness check for the kernel)
# ----------------------------------------------------------------------------
def at_reference(kdata, csms, mask):
    nrow, ncol = mask.shape
    sr = jnp.where(jnp.arange(nrow) % 2 == 0, -1.0, 1.0)
    sc = jnp.where(jnp.arange(ncol) % 2 == 0, -1.0, 1.0)
    flip = sr[:, None] * sc[None, :]
    k = kdata[..., 0] + 1j * kdata[..., 1]
    c = csms[..., 0] + 1j * csms[..., 1]
    km = k * mask[None, None, :, :]
    img = jnp.fft.ifft2(km, axes=(-2, -1))
    img = jnp.roll(img, nrow // 2, axis=-2)          # fft_shift_row
    img = img * flip[None, None, :, :]
    comb = jnp.sum(img * jnp.conj(c), axis=1)        # coil combine
    return jnp.stack([comb.real, comb.imag], axis=1).astype(jnp.float32)


if __name__ == "__main__":
    batch, ncoil, nrow, ncol = 2, 4, 32, 32

    key = jax.random.PRNGKey(0)
    kp, kd_key, cs_key, m_key = jax.random.split(key, 4)

    model = DCSTPmaskPallas(kp, ncoil=ncoil, nrow=nrow, ncol=ncol)

    kdata = jax.random.normal(kd_key, (batch, ncoil, nrow, ncol, 2),
                              dtype=jnp.float32)
    csms = jax.random.normal(cs_key, (batch, ncoil, nrow, ncol, 2),
                             dtype=jnp.float32)

    Xs = model.forward(kdata, csms, m_key)
    x = jax.block_until_ready(Xs[0])
    assert x.shape == (batch, 2, nrow, ncol)

    ref = at_reference(kdata, csms, model.masks)
    np.testing.assert_allclose(np.asarray(x), np.asarray(ref),
                               rtol=1e-2, atol=1e-3)
    print("KERNEL_OK")
</pallas_src>

<mosaic_0001>
module attributes {stable_mosaic.version = 11 : i64} {
  func.func @_at_kernel(%arg0: memref<64x256xf32, #tpu.memory_space<vmem>>, %arg1: memref<64x256xf32, #tpu.memory_space<vmem>>, %arg2: memref<64x64xf32, #tpu.memory_space<vmem>>, %arg3: memref<256x512xf32, #tpu.memory_space<vmem>>, %arg4: memref<256x256xf32, #tpu.memory_space<vmem>>, %arg5: memref<32x128xf32, #tpu.memory_space<vmem>>) attributes {dimension_semantics = [], scalar_prefetch = 0 : i64, scratch_operands = 0 : i64, tpu.core_type = #tpu.core_type<tc>} {
    %c0 = arith.constant 0 : index
    %c0_0 = arith.constant 0 : index
    %0 = vector.load %arg2[%c0, %c0_0] : memref<64x64xf32, #tpu.memory_space<vmem>>, vector<64x64xf32>
    %c0_1 = arith.constant 0 : index
    %c0_2 = arith.constant 0 : index
    %1 = vector.load %arg0[%c0_1, %c0_2] : memref<64x256xf32, #tpu.memory_space<vmem>>, vector<64x256xf32>
    %cst = arith.constant dense<0.000000e+00> : vector<64x256xf32>
    %2 = tpu.matmul %0, %1, %cst {dimension_numbers = #tpu.dot_dimension_numbers<[1], [0], [0], [1], [0, 0, 1, 1], [], []>} : vector<64x64xf32>, vector<64x256xf32>, vector<64x256xf32> -> vector<64x256xf32>
    %3 = vector.extract_strided_slice %2 {offsets = [0, 0], sizes = [32, 256], strides = [1, 1]} : vector<64x256xf32> to vector<32x256xf32>
    %4 = vector.extract_strided_slice %2 {offsets = [32, 0], sizes = [32, 256], strides = [1, 1]} : vector<64x256xf32> to vector<32x256xf32>
    %c0_3 = arith.constant 0 : index
    %c0_4 = arith.constant 0 : index
    %5 = vector.load %arg3[%c0_3, %c0_4] : memref<256x512xf32, #tpu.memory_space<vmem>>, vector<256x256xf32>
    %c0_5 = arith.constant 0 : index
    %c256 = arith.constant 256 : index
    %6 = vector.load %arg3[%c0_5, %c256] : memref<256x512xf32, #tpu.memory_space<vmem>>, vector<256x256xf32>
    %cst_6 = arith.constant dense<0.000000e+00> : vector<32x256xf32>
    %7 = tpu.matmul %3, %5, %cst_6 {dimension_numbers = #tpu.dot_dimension_numbers<[1], [0], [0], [1], [0, 0, 1, 1], [], []>} : vector<32x256xf32>, vector<256x256xf32>, vector<32x256xf32> -> vector<32x256xf32>
    %cst_7 = arith.constant dense<0.000000e+00> : vector<32x256xf32>
    %8 = tpu.matmul %4, %6, %cst_7 {dimension_numbers = #tpu.dot_dimension_numbers<[1], [0], [0], [1], [0, 0, 1, 1], [], []>} : vector<32x256xf32>, vector<256x256xf32>, vector<32x256xf32> -> vector<32x256xf32>
    %9 = arith.subf %7, %8 : vector<32x256xf32>
    %cst_8 = arith.constant dense<0.000000e+00> : vector<32x256xf32>
    %10 = tpu.matmul %3, %6, %cst_8 {dimension_numbers = #tpu.dot_dimension_numbers<[1], [0], [0], [1], [0, 0, 1, 1], [], []>} : vector<32x256xf32>, vector<256x256xf32>, vector<32x256xf32> -> vector<32x256xf32>
    %cst_9 = arith.constant dense<0.000000e+00> : vector<32x256xf32>
    %11 = tpu.matmul %4, %5, %cst_9 {dimension_numbers = #tpu.dot_dimension_numbers<[1], [0], [0], [1], [0, 0, 1, 1], [], []>} : vector<32x256xf32>, vector<256x256xf32>, vector<32x256xf32> -> vector<32x256xf32>
    %12 = arith.addf %10, %11 : vector<32x256xf32>
    %c0_10 = arith.constant 0 : index
    %c0_11 = arith.constant 0 : index
    %13 = vector.load %arg1[%c0_10, %c0_11] : memref<64x256xf32, #tpu.memory_space<vmem>>, vector<32x256xf32>
    %c32 = arith.constant 32 : index
    %c0_12 = arith.constant 0 : index
    %14 = vector.load %arg1[%c32, %c0_12] : memref<64x256xf32, #tpu.memory_space<vmem>>, vector<32x256xf32>
    %15 = arith.mulf %9, %13 : vector<32x256xf32>
    %16 = arith.mulf %12, %14 : vector<32x256xf32>
    %17 = arith.addf %15, %16 : vector<32x256xf32>
    %18 = arith.mulf %12, %13 : vector<32x256xf32>
    %19 = arith.mulf %9, %14 : vector<32x256xf32>
    %20 = arith.subf %18, %19 : vector<32x256xf32>
    %c0_13 = arith.constant 0 : index
    %c0_14 = arith.constant 0 : index
    %21 = vector.load %arg4[%c0_13, %c0_14] : memref<256x256xf32, #tpu.memory_space<vmem>>, vector<256x128xf32>
    %c0_15 = arith.constant 0 : index
    %c128 = arith.constant 128 : index
    %22 = vector.load %arg4[%c0_15, %c128] : memref<256x256xf32, #tpu.memory_space<vmem>>, vector<256x128xf32>
    %cst_16 = arith.constant dense<0.000000e+00> : vector<32x128xf32>
    %23 = tpu.matmul %17, %21, %cst_16 {dimension_numbers = #tpu.dot_dimension_numbers<[1], [0], [0], [1], [0, 0, 1, 1], [], []>} : vector<32x256xf32>, vector<256x128xf32>, vector<32x128xf32> -> vector<32x128xf32>
    %cst_17 = arith.constant dense<0.000000e+00> : vector<32x128xf32>
    %24 = tpu.matmul %20, %22, %cst_17 {dimension_numbers = #tpu.dot_dimension_numbers<[1], [0], [0], [1], [0, 0, 1, 1], [], []>} : vector<32x256xf32>, vector<256x128xf32>, vector<32x128xf32> -> vector<32x128xf32>
    %25 = arith.addf %23, %24 : vector<32x128xf32>
    %c0_18 = arith.constant 0 : index
    %c0_19 = arith.constant 0 : index
    %26 = vector.load %arg5[%c0_18, %c0_19] : memref<32x128xf32, #tpu.memory_space<vmem>>, vector<32x128xf32>
    tpu.vector_store %arg5[%c0_18, %c0_19], %25 {strides = array<i32>} : memref<32x128xf32, #tpu.memory_space<vmem>>, vector<32x128xf32>,
    return
  }
}

</mosaic_0001>

<llo_original>
// kernel: tpu_custom_call.1
$region0: #{tpu_custom_call.1}
  #allocation0 [shape = 'u32[]', space=smem, size = 0x4, offset = 0x4, fixed_abs, tag = 'smem constant byte address 0x4 - core index']
  #allocation1 [shape = 'u32[144,128]{1,0:T(1,128)}', space=vmem, size = 0x12000, scoped, tag = 'internal scratch']
  %s0 = inlined_call_operand.hbm [shape: f32[64,256], index: 0, kind: input, shape index: {}]
  %s1 = inlined_call_operand.hbm [shape: f32[64,256], index: 1, kind: input, shape index: {}]
  %s2 = inlined_call_operand.hbm [shape: f32[64,64], index: 2, kind: input, shape index: {}]
  %s3 = inlined_call_operand.hbm [shape: f32[256,512], index: 3, kind: input, shape index: {}]
  %s4 = inlined_call_operand.hbm [shape: f32[256,256], index: 4, kind: input, shape index: {}]
  %s5 = inlined_call_operand.hbm [shape: f32[32,128], index: 5, kind: output, shape index: {}]
  %s6 = sld [smem:[#allocation0]]
  $region50: #{tpu_custom_call.1} parent=0
    _
  %s8 = ssub.s32 1, %s6
  %s9 = scalar_select 0, %s8, %s6
  $region1: #{tpu_custom_call.1} parent=0
    #allocation2 [shape = 'u8[65536]{0}', space=vmem, size = 0x10000, scoped, tag = 'input window, operand 0, single buffered']
    #allocation3 [shape = 's32[1]{0}', space=sflag, size = 0x4, scoped, tag = 'scoped memory for tpu_custom_call.1']
    #allocation4 [shape = 's32[1]{0}', space=sflag, size = 0x4, scoped, tag = 'scoped memory for tpu_custom_call.1']
    #allocation5 [shape = 'u8[65536]{0}', space=vmem, size = 0x10000, scoped, tag = 'input window, operand 1, single buffered']
    #allocation6 [shape = 's32[1]{0}', space=sflag, size = 0x4, scoped, tag = 'scoped memory for tpu_custom_call.1']
    #allocation7 [shape = 'u8[32768]{0}', space=vmem, size = 0x8000, scoped, tag = 'input window, operand 2, single buffered']
    #allocation8 [shape = 'u8[524288]{0}', space=vmem, size = 0x80000, scoped, tag = 'input window, operand 3, single buffered']
    #allocation9 [shape = 's32[1]{0}', space=sflag, size = 0x4, scoped, tag = 'scoped memory for tpu_custom_call.1']
    #allocation10 [shape = 'u8[262144]{0}', space=vmem, size = 0x40000, scoped, tag = 'input window, operand 4, single buffered']
    #allocation11 [shape = 'u8[16384]{0}', space=vmem, size = 0x4000, scoped, tag = 'output window, operand 0, single buffered']
    %10 = vsyncpa [#allocation3], 0
    %11 = vsyncpa [#allocation6], 0
    %12 = vsyncpa [#allocation9], 0
    %13 = vsyncpa [#allocation4], 0
    // Predicated region
    $region2: #{tpu_custom_call.1} parent=1 // pred_check
      _
    $region3: #{tpu_custom_call.1} parent=1 // pred_check_branch
      %15 = sbr.rel (0) target = $region5
    $region4: #{tpu_custom_call.1} parent=1 // pred_region
      %s17 = ssub.s32 2048, 2048
      %18 = vsyncadd [#allocation3], %s17
      %s19 = sshll.u32 [#allocation2], 4
      %s20 = int_to_ptr.vmem [resolvable:$true] %s19
      %25 = dma.hbm_to_vmem [thread:$0]  %s0, 2048, %s20, [#allocation3], 256, 256, 16
    $region5: #{tpu_custom_call.1} parent=1 // pred_fallthru
      _
    // Predicated region
    $region6: #{tpu_custom_call.1} parent=1 // pred_check
      _
    $region7: #{tpu_custom_call.1} parent=1 // pred_check_branch
      %27 = sbr.rel (0) target = $region9
    $region8: #{tpu_custom_call.1} parent=1 // pred_region
      %s29 = ssub.s32 2048, 2048
      %30 = vsyncadd [#allocation6], %s29
      %s31 = sshll.u32 [#allocation5], 4
      %s32 = int_to_ptr.vmem [resolvable:$true] %s31
      %37 = dma.hbm_to_vmem [thread:$0]  %s1, 2048, %s32, [#allocation6], 256, 256, 16
    $region9: #{tpu_custom_call.1} parent=1 // pred_fallthru
      _
    // Predicated region
    $region10: #{tpu_custom_call.1} parent=1 // pred_check
      _
    $region11: #{tpu_custom_call.1} parent=1 // pred_check_branch
      %39 = sbr.rel (0) target = $region13
    $region12: #{tpu_custom_call.1} parent=1 // pred_region
      %s41 = ssub.s32 1024, 1024
      %42 = vsyncadd [#allocation6], %s41
      %s43 = sshll.u32 [#allocation7], 4
      %s44 = int_to_ptr.vmem [resolvable:$true] %s43
      %49 = dma.hbm_to_vmem [thread:$0]  %s2, 1024, %s44, [#allocation6], 128, 128, 8
    $region13: #{tpu_custom_call.1} parent=1 // pred_fallthru
      _
    // Predicated region
    $region14: #{tpu_custom_call.1} parent=1 // pred_check
      _
    $region15: #{tpu_custom_call.1} parent=1 // pred_check_branch
      %51 = sbr.rel (0) target = $region17
    $region16: #{tpu_custom_call.1} parent=1 // pred_region
      %s53 = ssub.s32 16384, 16384
      %54 = vsyncadd [#allocation9], %s53
      %s55 = sshll.u32 [#allocation8], 4
      %s56 = int_to_ptr.vmem [resolvable:$true] %s55
      %61 = dma.hbm_to_vmem [thread:$0]  %s3, 16384, %s56, [#allocation9], 512, 512, 32
    $region17: #{tpu_custom_call.1} parent=1 // pred_fallthru
      _
    // Predicated region
    $region18: #{tpu_custom_call.1} parent=1 // pred_check
      _
    $region19: #{tpu_custom_call.1} parent=1 // pred_check_branch
      %63 = sbr.rel (0) target = $region21
    $region20: #{tpu_custom_call.1} parent=1 // pred_region
      %s65 = ssub.s32 8192, 8192
      %66 = vsyncadd [#allocation9], %s65
      %s67 = sshll.u32 [#allocation10], 4
      %s68 = int_to_ptr.vmem [resolvable:$true] %s67
      %73 = dma.hbm_to_vmem [thread:$0]  %s4, 8192, %s68, [#allocation9], 256, 256, 16
    $region21: #{tpu_custom_call.1} parent=1 // pred_fallthru
      _
    // Predicated region
    $region22: #{tpu_custom_call.1} parent=1 // pred_check
      _
    $region23: #{tpu_custom_call.1} parent=1 // pred_check_branch
      %75 = sbr.rel (0) target = $region25
    $region24: #{tpu_custom_call.1} parent=1 // pred_region
      %76 = dma.done [#allocation3], 2048
    $region25: #{tpu_custom_call.1} parent=1 // pred_fallthru
      _
    // Predicated region
    $region26: #{tpu_custom_call.1} parent=1 // pred_check
      _
    $region27: #{tpu_custom_call.1} parent=1 // pred_check_branch
      %78 = sbr.rel (0) target = $region29
    $region28: #{tpu_custom_call.1} parent=1 // pred_region
      %79 = dma.done [#allocation6], 2048
    $region29: #{tpu_custom_call.1} parent=1 // pred_fallthru
      _
    // Predicated region
    $region30: #{tpu_custom_call.1} parent=1 // pred_check
      _
    $region31: #{tpu_custom_call.1} parent=1 // pred_check_branch
      %81 = sbr.rel (0) target = $region33
    $region32: #{tpu_custom_call.1} parent=1 // pred_region
      %82 = dma.done [#allocation6], 1024
    $region33: #{tpu_custom_call.1} parent=1 // pred_fallthru
      _
    // Predicated region
    $region34: #{tpu_custom_call.1} parent=1 // pred_check
      _
    $region35: #{tpu_custom_call.1} parent=1 // pred_check_branch
      %84 = sbr.rel (0) target = $region37
    $region36: #{tpu_custom_call.1} parent=1 // pred_region
      %85 = dma.done [#allocation9], 16384
    $region37: #{tpu_custom_call.1} parent=1 // pred_fallthru
      _
    // Predicated region
    $region38: #{tpu_custom_call.1} parent=1 // pred_check
      _
    $region39: #{tpu_custom_call.1} parent=1 // pred_check_branch
      %87 = sbr.rel (0) target = $region41
    $region40: #{tpu_custom_call.1} parent=1 // pred_region
      %88 = dma.done [#allocation9], 8192
    $region41: #{tpu_custom_call.1} parent=1 // pred_fallthru
      _
    %v89 = vld [vmem:[#allocation7] sm:$0xff]
    %v90 = vld [vmem:[#allocation7 + $0x8] sm:$0xff]
    %v91 = vld [vmem:[#allocation7 + $0x10] sm:$0xff]
    %v92 = vld [vmem:[#allocation7 + $0x18] sm:$0xff]
    %v93 = vld [vmem:[#allocation7 + $0x20] sm:$0xff]
    %v94 = vld [vmem:[#allocation7 + $0x28] sm:$0xff]
    %v95 = vld [vmem:[#allocation7 + $0x30] sm:$0xff]
    %v96 = vld [vmem:[#allocation7 + $0x38] sm:$0xff]
    %v97 = vld [vmem:[#allocation2] sm:$0xff]
    %v98 = vld [vmem:[#allocation2 + $0x8] sm:$0xff]
    %v99 = vld [vmem:[#allocation2 + $0x10] sm:$0xff]
    %v100 = vld [vmem:[#allocation2 + $0x18] sm:$0xff]
    %v101 = vld [vmem:[#allocation2 + $0x20] sm:$0xff]
    %v102 = vld [vmem:[#allocation2 + $0x28] sm:$0xff]
    %v103 = vld [vmem:[#allocation2 + $0x30] sm:$0xff]
    %v104 = vld [vmem:[#allocation2 + $0x38] sm:$0xff]
    %v105 = vld [vmem:[#allocation2 + $0x40] sm:$0xff]
    %v106 = vld [vmem:[#allocation2 + $0x48] sm:$0xff]
    %v107 = vld [vmem:[#allocation2 + $0x50] sm:$0xff]
    %v108 = vld [vmem:[#allocation2 + $0x58] sm:$0xff]
    %v109 = vld [vmem:[#allocation2 + $0x60] sm:$0xff]
    %v110 = vld [vmem:[#allocation2 + $0x68] sm:$0xff]
    %v111 = vld [vmem:[#allocation2 + $0x70] sm:$0xff]
    %v112 = vld [vmem:[#allocation2 + $0x78] sm:$0xff]
    %vm113 = vcmask 523264
    %v115 = vsel %vm113, %v89, 0
    %v118 = vsel %vm113, %v90, 0
    %v121 = vsel %vm113, %v91, 0
    %v124 = vsel %vm113, %v92, 0
    %v127 = vsel %vm113, %v93, 0
    %v130 = vsel %vm113, %v94, 0
    %v133 = vsel %vm113, %v95, 0
    %v136 = vsel %vm113, %v96, 0
    %138 = vmatprep.subr.mxu0 %v98
    %139 = vmatpush1.msra.mxu0 %v97
    %140 = vmatprep.subr.mxu0 %v100
    %141 = vmatpush1.msra.mxu0 %v99
    %142 = vmatprep.subr.mxu0 %v102
    %143 = vmatpush1.msra.mxu0 %v101
    %144 = vmatprep.subr.mxu0 %v104
    %145 = vmatpush1.msra.mxu0 %v103
    %146 = vmatprep.subr.mxu0 %v106
    %147 = vmatpush1.msra.mxu0 %v105
    %148 = vmatprep.subr.mxu0 %v108
    %149 = vmatpush1.msra.mxu0 %v107
    %150 = vmatprep.subr.mxu0 %v110
    %151 = vmatpush1.msra.mxu0 %v109
    %152 = vmatprep.subr.mxu0 %v112
    %153 = vmatpush1.msra.mxu0 %v111
    %154 = vmatprep.subr.mxu0 0.0
    %155 = vmatpush1.msra.mxu0 0.0
    %156 = vmatprep.subr.mxu0 0.0
    %157 = vmatpush1.msra.mxu0 0.0
    %158 = vmatprep.subr.mxu0 0.0
    %159 = vmatpush1.msra.mxu0 0.0
    %160 = vmatprep.subr.mxu0 0.0
    %161 = vmatpush1.msra.mxu0 0.0
    %162 = vmatprep.subr.mxu0 0.0
    %163 = vmatpush1.msra.mxu0 0.0
    %164 = vmatprep.subr.mxu0 0.0
    %165 = vmatpush1.msra.mxu0 0.0
    %166 = vmatprep.subr.mxu0 0.0
    %167 = vmatpush1.msra.mxu0 0.0
    %168 = vmatprep.subr.mxu0 0.0
    %169 = vmatpush1.msra.mxu0 0.0
    %170 = vmatprep.subr.mxu0 0.0
    %171 = vmatpush1.msra.mxu0 0.0
    %172 = vmatprep.subr.mxu0 0.0
    %173 = vmatpush1.msra.mxu0 0.0
    %174 = vmatprep.subr.mxu0 0.0
    %175 = vmatpush1.msra.mxu0 0.0
    %176 = vmatprep.subr.mxu0 0.0
    %177 = vmatpush1.msra.mxu0 0.0
    %178 = vmatprep.subr.mxu0 0.0
    %179 = vmatpush1.msra.mxu0 0.0
    %180 = vmatprep.subr.mxu0 0.0
    %181 = vmatpush1.msra.mxu0 0.0
    %182 = vmatprep.subr.mxu0 0.0
    %183 = vmatpush1.msra.mxu0 0.0
    %184 = vmatprep.subr.mxu0 0.0
    %185 = vmatpush1.msra.mxu0 0.0
    %186 = vmatprep.subr.mxu0 0.0
    %187 = vmatpush1.msra.mxu0 0.0
    %188 = vmatprep.subr.mxu0 0.0
    %189 = vmatpush1.msra.mxu0 0.0
    %190 = vmatprep.subr.mxu0 0.0
    %191 = vmatpush1.msra.mxu0 0.0
    %192 = vmatprep.subr.mxu0 0.0
    %193 = vmatpush1.msra.mxu0 0.0
    %194 = vmatprep.subr.mxu0 0.0
    %195 = vmatpush1.msra.mxu0 0.0
    %196 = vmatprep.subr.mxu0 0.0
    %197 = vmatpush1.msra.mxu0 0.0
    %198 = vmatprep.subr.mxu0 0.0
    %199 = vmatpush1.msra.mxu0 0.0
    %200 = vmatprep.subr.mxu0 0.0
    %201 = vmatpush1.msra.mxu0 0.0
    %202 = vmatprep.mubr.f32.mxu0 0.0
    %203 = vmatmul.mubr.f32.gmra.mrb[0].mxu0 %v115
    %v204 = vpop.f32.mrb[0].mxu0
    %v205 = vadd.f32 0.0, %v204
    %v206 = vpop.f32.mrb[0].mxu0
    %v207 = vadd.f32 0.0, %v206
    %208 = vmatprep.mubr.f32.mxu0 0.0
    %209 = vmatmul.mubr.f32.gmra.mrb[0].mxu0 %v118
    %v210 = vpop.f32.mrb[0].mxu0
    %v211 = vadd.f32 0.0, %v210
    %v212 = vpop.f32.mrb[0].mxu0
    %v213 = vadd.f32 0.0, %v212
    %214 = vmatprep.mubr.f32.mxu0 0.0
    %215 = vmatmul.mubr.f32.gmra.mrb[0].mxu0 %v121
    %v216 = vpop.f32.mrb[0].mxu0
    %v217 = vadd.f32 0.0, %v216
    %v218 = vpop.f32.mrb[0].mxu0
    %v219 = vadd.f32 0.0, %v218
    %220 = vmatprep.mubr.f32.mxu0 0.0
    %221 = vmatmul.mubr.f32.gmra.mrb[0].mxu0 %v124
    %v222 = vpop.f32.mrb[0].mxu0
    %v223 = vadd.f32 0.0, %v222
    %v224 = vpop.f32.mrb[0].mxu0
    %v225 = vadd.f32 0.0, %v224
    %226 = vmatprep.mubr.f32.mxu0 0.0
    %227 = vmatmul.mubr.f32.gmra.mrb[0].mxu0 %v127
    %v228 = vpop.f32.mrb[0].mxu0
    %v229 = vadd.f32 0.0, %v228
    %v230 = vpop.f32.mrb[0].mxu0
    %v231 = vadd.f32 0.0, %v230
    %232 = vmatprep.mubr.f32.mxu0 0.0
    %233 = vmatmul.mubr.f32.gmra.mrb[0].mxu0 %v130
    %v234 = vpop.f32.mrb[0].mxu0
    %v235 = vadd.f32 0.0, %v234
    %v236 = vpop.f32.mrb[0].mxu0
    %v237 = vadd.f32 0.0, %v236
    %238 = vmatprep.mubr.f32.mxu0 0.0
    %239 = vmatmul.mubr.f32.gmra.mrb[0].mxu0 %v133
    %v240 = vpop.f32.mrb[0].mxu0
    %v241 = vadd.f32 0.0, %v240
    %v242 = vpop.f32.mrb[0].mxu0
    %v243 = vadd.f32 0.0, %v242
    %244 = vmatprep.mubr.f32.mxu0 0.0
    %245 = vmatmul.mubr.f32.gmra.mrb[0].mxu0 %v136
    %v246 = vpop.f32.mrb[0].mxu0
    %v247 = vadd.f32 0.0, %v246
    %v248 = vpop.f32.mrb[0].mxu0
    %v249 = vadd.f32 0.0, %v248
    %250 = vdwg.mxu0
    %v251 = vld [vmem:[#allocation8] sm:$0xff]
    %v252 = vld [vmem:[#allocation8 + $0x8] sm:$0xff]
    %v253 = vld [vmem:[#allocation8 + $0x20] sm:$0xff]
    %v254 = vld [vmem:[#allocation8 + $0x28] sm:$0xff]
    %v255 = vld [vmem:[#allocation8 + $0x40] sm:$0xff]
    %v256 = vld [vmem:[#allocation8 + $0x48] sm:$0xff]
    %v257 = vld [vmem:[#allocation8 + $0x60] sm:$0xff]
    %v258 = vld [vmem:[#allocation8 + $0x68] sm:$0xff]
    %v259 = vld [vmem:[#allocation8 + $0x80] sm:$0xff]
    %v260 = vld [vmem:[#allocation8 + $0x88] sm:$0xff]
    %v261 = vld [vmem:[#allocation8 + $0xa0] sm:$0xff]
    %v262 = vld [vmem:[#allocation8 + $0xa8] sm:$0xff]
    %v263 = vld [vmem:[#allocation8 + $0xc0] sm:$0xff]
    %v264 = vld [vmem:[#allocation8 + $0xc8] sm:$0xff]
    %v265 = vld [vmem:[#allocation8 + $0xe0] sm:$0xff]
    %v266 = vld [vmem:[#allocation8 + $0xe8] sm:$0xff]
    %v267 = vld [vmem:[#allocation8 + $0x100] sm:$0xff]
    %v268 = vld [vmem:[#allocation8 + $0x108] sm:$0xff]
    %v269 = vld [vmem:[#allocation8 + $0x120] sm:$0xff]
    %v270 = vld [vmem:[#allocation8 + $0x128] sm:$0xff]
    %v271 = vld [vmem:[#allocation8 + $0x140] sm:$0xff]
    %v272 = vld [vmem:[#allocation8 + $0x148] sm:$0xff]
    %v273 = vld [vmem:[#allocation8 + $0x160] sm:$0xff]
    %v274 = vld [vmem:[#allocation8 + $0x168] sm:$0xff]
    %v275 = vld [vmem:[#allocation8 + $0x180] sm:$0xff]
    %v276 = vld [vmem:[#allocation8 + $0x188] sm:$0xff]
    %v277 = vld [vmem:[#allocation8 + $0x1a0] sm:$0xff]
    %v278 = vld [vmem:[#allocation8 + $0x1a8] sm:$0xff]
    %v279 = vld [vmem:[#allocation8 + $0x1c0] sm:$0xff]
    %v280 = vld [vmem:[#allocation8 + $0x1c8] sm:$0xff]
    %v281 = vld [vmem:[#allocation8 + $0x1e0] sm:$0xff]
    %v282 = vld [vmem:[#allocation8 + $0x1e8] sm:$0xff]
    %v283 = vld [vmem:[#allocation8 + $0x200] sm:$0xff]
    %v284 = vld [vmem:[#allocation8 + $0x208] sm:$0xff]
    %v285 = vld [vmem:[#allocation8 + $0x220] sm:$0xff]
    %v286 = vld [vmem:[#allocation8 + $0x228] sm:$0xff]
    %v287 = vld [vmem:[#allocation8 + $0x240] sm:$0xff]
    %v288 = vld [vmem:[#allocation8 + $0x248] sm:$0xff]
    %v289 = vld [vmem:[#allocation8 + $0x260] sm:$0xff]
    %v290 = vld [vmem:[#allocation8 + $0x268] sm:$0xff]
    %v291 = vld [vmem:[#allocation8 + $0x280] sm:$0xff]
    %v292 = vld [vmem:[#allocation8 + $0x288] sm:$0xff]
    %v293 = vld [vmem:[#allocation8 + $0x2a0] sm:$0xff]
    %v294 = vld [vmem:[#allocation8 + $0x2a8] sm:$0xff]
    %v295 = vld [vmem:[#allocation8 + $0x2c0] sm:$0xff]
    %v296 = vld [vmem:[#allocation8 + $0x2c8] sm:$0xff]
    %v297 = vld [vmem:[#allocation8 + $0x2e0] sm:$0xff]
    %v298 = vld [vmem:[#allocation8 + $0x2e8] sm:$0xff]
    %v299 = vld [vmem:[#allocation8 + $0x300] sm:$0xff]
    %v300 = vld [vmem:[#allocation8 + $0x308] sm:$0xff]
    %v301 = vld [vmem:[#allocation8 + $0x320] sm:$0xff]
    %v302 = vld [vmem:[#allocation8 + $0x328] sm:$0xff]
    %v303 = vld [vmem:[#allocation8 + $0x340] sm:$0xff]
    %v304 = vld [vmem:[#allocation8 + $0x348] sm:$0xff]
    %v305 = vld [vmem:[#allocation8 + $0x360] sm:$0xff]
    %v306 = vld [vmem:[#allocation8 + $0x368] sm:$0xff]
    %v307 = vld [vmem:[#allocation8 + $0x380] sm:$0xff]
    %v308 = vld [vmem:[#allocation8 + $0x388] sm:$0xff]
    %v309 = vld [vmem:[#allocation8 + $0x3a0] sm:$0xff]
    %v310 = vld [vmem:[#allocation8 + $0x3a8] sm:$0xff]
    %v311 = vld [vmem:[#allocation8 + $0x3c0] sm:$0xff]
    %v312 = vld [vmem:[#allocation8 + $0x3c8] sm:$0xff]
    %v313 = vld [vmem:[#allocation8 + $0x3e0] sm:$0xff]
    %v314 = vld [vmem:[#allocation8 + $0x3e8] sm:$0xff]
    %v315 = vld [vmem:[#allocation8 + $0x10] sm:$0xff]
    %v316 = vld [vmem:[#allocation8 + $0x18] sm:$0xff]
    %v317 = vld [vmem:[#allocation8 + $0x30] sm:$0xff]
    %v318 = vld [vmem:[#allocation8 + $0x38] sm:$0xff]
    %v319 = vld [vmem:[#allocation8 + $0x50] sm:$0xff]
    %v320 = vld [vmem:[#allocation8 + $0x58] sm:$0xff]
    %v321 = vld [vmem:[#allocation8 + $0x70] sm:$0xff]
    %v322 = vld [vmem:[#allocation8 + $0x78] sm:$0xff]
    %v323 = vld [vmem:[#allocation8 + $0x90] sm:$0xff]
    %v324 = vld [vmem:[#allocation8 + $0x98] sm:$0xff]
    %v325 = vld [vmem:[#allocation8 + $0xb0] sm:$0xff]
    %v326 = vld [vmem:[#allocation8 + $0xb8] sm:$0xff]
    %v327 = vld [vmem:[#allocation8 + $0xd0] sm:$0xff]
    %v328 = vld [vmem:[#allocation8 + $0xd8] sm:$0xff]
    %v329 = vld [vmem:[#allocation8 + $0xf0] sm:$0xff]
    %v330 = vld [vmem:[#allocation8 + $0xf8] sm:$0xff]
    %v331 = vld [vmem:[#allocation8 + $0x110] sm:$0xff]
    %v332 = vld [vmem:[#allocation8 + $0x118] sm:$0xff]
    %v333 = vld [vmem:[#allocation8 + $0x130] sm:$0xff]
    %v334 = vld [vmem:[#allocation8 + $0x138] sm:$0xff]
    %v335 = vld [vmem:[#allocation8 + $0x150] sm:$0xff]
    %v336 = vld [vmem:[#allocation8 + $0x158] sm:$0xff]
    %v337 = vld [vmem:[#allocation8 + $0x170] sm:$0xff]
    %v338 = vld [vmem:[#allocation8 + $0x178] sm:$0xff]
    %v339 = vld [vmem:[#allocation8 + $0x190] sm:$0xff]
    %v340 = vld [vmem:[#allocation8 + $0x198] sm:$0xff]
    %v341 = vld [vmem:[#allocation8 + $0x1b0] sm:$0xff]
    %v342 = vld [vmem:[#allocation8 + $0x1b8] sm:$0xff]
    %v343 = vld [vmem:[#allocation8 + $0x1d0] sm:$0xff]
    %v344 = vld [vmem:[#allocation8 + $0x1d8] sm:$0xff]
    %v345 = vld [vmem:[#allocation8 + $0x1f0] sm:$0xff]
    %v346 = vld [vmem:[#allocation8 + $0x1f8] sm:$0xff]
    %v347 = vld [vmem:[#allocation8 + $0x210] sm:$0xff]
    %v348 = vld [vmem:[#allocation8 + $0x218] sm:$0xff]
    %v349 = vld [vmem:[#allocation8 + $0x230] sm:$0xff]
    %v350 = vld [vmem:[#allocation8 + $0x238] sm:$0xff]
    %v351 = vld [vmem:[#allocation8 + $0x250] sm:$0xff]
    %v352 = vld [vmem:[#allocation8 + $0x258] sm:$0xff]
    %v353 = vld [vmem:[#allocation8 + $0x270] sm:$0xff]
    %v354 = vld [vmem:[#allocation8 + $0x278] sm:$0xff]
    %v355 = vld [vmem:[#allocation8 + $0x290] sm:$0xff]
    %v356 = vld [vmem:[#allocation8 + $0x298] sm:$0xff]
    %v357 = vld [vmem:[#allocation8 + $0x2b0] sm:$0xff]
    %v358 = vld [vmem:[#allocation8 + $0x2b8] sm:$0xff]
    %v359 = vld [vmem:[#allocation8 + $0x2d0] sm:$0xff]
    %v360 = vld [vmem:[#allocation8 + $0x2d8] sm:$0xff]
    %v361 = vld [vmem:[#allocation8 + $0x2f0] sm:$0xff]
    %v362 = vld [vmem:[#allocation8 + $0x2f8] sm:$0xff]
    %v363 = vld [vmem:[#allocation8 + $0x310] sm:$0xff]
    %v364 = vld [vmem:[#allocation8 + $0x318] sm:$0xff]
    %v365 = vld [vmem:[#allocation8 + $0x330] sm:$0xff]
    %v366 = vld [vmem:[#allocation8 + $0x338] sm:$0xff]
    %v367 = vld [vmem:[#allocation8 + $0x350] sm:$0xff]
    %v368 = vld [vmem:[#allocation8 + $0x358] sm:$0xff]
    %v369 = vld [vmem:[#allocation8 + $0x370] sm:$0xff]
    %v370 = vld [vmem:[#allocation8 + $0x378] sm:$0xff]
    %v371 = vld [vmem:[#allocation8 + $0x390] sm:$0xff]
    %v372 = vld [vmem:[#allocation8 + $0x398] sm:$0xff]
    %v373 = vld [vmem:[#allocation8 + $0x3b0] sm:$0xff]
    %v374 = vld [vmem:[#allocation8 + $0x3b8] sm:$0xff]
    %v375 = vld [vmem:[#allocation8 + $0x3d0] sm:$0xff]
    %v376 = vld [vmem:[#allocation8 + $0x3d8] sm:$0xff]
    %v377 = vld [vmem:[#allocation8 + $0x3f0] sm:$0xff]
    %v378 = vld [vmem:[#allocation8 + $0x3f8] sm:$0xff]
    %379 = vmatprep.subr.mxu0 %v252
    %380 = vmatpush1.msra.mxu0 %v251
    %381 = vmatprep.subr.mxu0 %v254
    %382 = vmatpush1.msra.mxu0 %v253
    %383 = vmatprep.subr.mxu0 %v256
    %384 = vmatpush1.msra.mxu0 %v255
    %385 = vmatprep.subr.mxu0 %v258
    %386 = vmatpush1.msra.mxu0 %v257
    %387 = vmatprep.subr.mxu0 %v260
    %388 = vmatpush1.msra.mxu0 %v259
    %389 = vmatprep.subr.mxu0 %v262
    %390 = vmatpush1.msra.mxu0 %v261
    %391 = vmatprep.subr.mxu0 %v264
    %392 = vmatpush1.msra.mxu0 %v263
    %393 = vmatprep.subr.mxu0 %v266
    %394 = vmatpush1.msra.mxu0 %v265
    %395 = vmatprep.subr.mxu0 %v268
    %396 = vmatpush1.msra.mxu0 %v267
    %397 = vmatprep.subr.mxu0 %v270
    %398 = vmatpush1.msra.mxu0 %v269
    %399 = vmatprep.subr.mxu0 %v272
    %400 = vmatpush1.msra.mxu0 %v271
    %401 = vmatprep.subr.mxu0 %v274
    %402 = vmatpush1.msra.mxu0 %v273
    %403 = vmatprep.subr.mxu0 %v276
    %404 = vmatpush1.msra.mxu0 %v275
    %405 = vmatprep.subr.mxu0 %v278
    %406 = vmatpush1.msra.mxu0 %v277
    %407 = vmatprep.subr.mxu0 %v280
    %408 = vmatpush1.msra.mxu0 %v279
    %409 = vmatprep.subr.mxu0 %v282
    %410 = vmatpush1.msra.mxu0 %v281
    %411 = vmatprep.subr.mxu0 %v284
    %412 = vmatpush1.msra.mxu0 %v283
    %413 = vmatprep.subr.mxu0 %v286
    %414 = vmatpush1.msra.mxu0 %v285
    %415 = vmatprep.subr.mxu0 %v288
    %416 = vmatpush1.msra.mxu0 %v287
    %417 = vmatprep.subr.mxu0 %v290
    %418 = vmatpush1.msra.mxu0 %v289
    %419 = vmatprep.subr.mxu0 %v292
    %420 = vmatpush1.msra.mxu0 %v291
    %421 = vmatprep.subr.mxu0 %v294
    %422 = vmatpush1.msra.mxu0 %v293
    %423 = vmatprep.subr.mxu0 %v296
    %424 = vmatpush1.msra.mxu0 %v295
    %425 = vmatprep.subr.mxu0 %v298
    %426 = vmatpush1.msra.mxu0 %v297
    %427 = vmatprep.subr.mxu0 %v300
    %428 = vmatpush1.msra.mxu0 %v299
    %429 = vmatprep.subr.mxu0 %v302
    %430 = vmatpush1.msra.mxu0 %v301
    %431 = vmatprep.subr.mxu0 %v304
    %432 = vmatpush1.msra.mxu0 %v303
    %433 = vmatprep.subr.mxu0 %v306
    %434 = vmatpush1.msra.mxu0 %v305
    %435 = vmatprep.subr.mxu0 %v308
    %436 = vmatpush1.msra.mxu0 %v307
    %437 = vmatprep.subr.mxu0 %v310
    %438 = vmatpush1.msra.mxu0 %v309
    %439 = vmatprep.subr.mxu0 %v312
    %440 = vmatpush1.msra.mxu0 %v311
    %441 = vmatprep.subr.mxu0 %v314
    %442 = vmatpush1.msra.mxu0 %v313
    %443 = vmatprep.mubr.f32.mxu0 %v207
    %444 = vmatmul.mubr.f32.gmra.mrb[0].mxu0 %v205
    %v445 = vpop.f32.mrb[0].mxu0
    %v446 = vadd.f32 0.0, %v445
    %v447 = vpop.f32.mrb[0].mxu0
    %v448 = vadd.f32 0.0, %v447
    %449 = vmatprep.mubr.f32.mxu0 %v213
    %450 = vmatmul.mubr.f32.gmra.mrb[0].mxu0 %v211
    %v451 = vpop.f32.mrb[0].mxu0
    %v452 = vadd.f32 0.0, %v451
    %v453 = vpop.f32.mrb[0].mxu0
    %v454 = vadd.f32 0.0, %v453
    %455 = vmatprep.mubr.f32.mxu0 %v219
    %456 = vmatmul.mubr.f32.gmra.mrb[0].mxu0 %v217
    %v457 = vpop.f32.mrb[0].mxu0
    %v458 = vadd.f32 0.0, %v457
    %v459 = vpop.f32.mrb[0].mxu0
    %v460 = vadd.f32 0.0, %v459
    %461 = vmatprep.mubr.f32.mxu0 %v225
    %462 = vmatmul.mubr.f32.gmra.mrb[0].mxu0 %v223
    %v463 = vpop.f32.mrb[0].mxu0
    %v464 = vadd.f32 0.0, %v463
    %v465 = vpop.f32.mrb[0].mxu0
    %v466 = vadd.f32 0.0, %v465
    %467 = vdwg.mxu0
    %468 = vmatprep.subr.mxu0 %v316
    %469 = vmatpush1.msra.mxu0 %v315
    %470 = vmatprep.subr.mxu0 %v318
    %471 = vmatpush1.msra.mxu0 %v317
    %472 = vmatprep.subr.mxu0 %v320
    %473 = vmatpush1.msra.mxu0 %v319
    %474 = vmatprep.subr.mxu0 %v322
    %475 = vmatpush1.msra.mxu0 %v321
    %476 = vmatprep.subr.mxu0 %v324
    %477 = vmatpush1.msra.mxu0 %v323
    %478 = vmatprep.subr.mxu0 %v326
    %479 = vmatpush1.msra.mxu0 %v325
    %480 = vmatprep.subr.mxu0 %v328
    %481 = vmatpush1.msra.mxu0 %v327
    %482 = vmatprep.subr.mxu0 %v330
    %483 = vmatpush1.msra.mxu0 %v329
    %484 = vmatprep.subr.mxu0 %v332
    %485 = vmatpush1.msra.mxu0 %v331
    %486 = vmatprep.subr.mxu0 %v334
    %487 = vmatpush1.msra.mxu0 %v333
    %488 = vmatprep.subr.mxu0 %v336
    %489 = vmatpush1.msra.mxu0 %v335
    %490 = vmatprep.subr.mxu0 %v338
    %491 = vmatpush1.msra.mxu0 %v337
    %492 = vmatprep.subr.mxu0 %v340
    %493 = vmatpush1.msra.mxu0 %v339
    %494 = vmatprep.subr.mxu0 %v342
    %495 = vmatpush1.msra.mxu0 %v341
    %496 = vmatprep.subr.mxu0 %v344
    %497 = vmatpush1.msra.mxu0 %v343
    %498 = vmatprep.subr.mxu0 %v346
    %499 = vmatpush1.msra.mxu0 %v345
    %500 = vmatprep.subr.mxu0 %v348
    %501 = vmatpush1.msra.mxu0 %v347
    %502 = vmatprep.subr.mxu0 %v350
    %503 = vmatpush1.msra.mxu0 %v349
    %504 = vmatprep.subr.mxu0 %v352
    %505 = vmatpush1.msra.mxu0 %v351
    %506 = vmatprep.subr.mxu0 %v354
    %507 = vmatpush1.msra.mxu0 %v353
    %508 = vmatprep.subr.mxu0 %v356
    %509 = vmatpush1.msra.mxu0 %v355
    %510 = vmatprep.subr.mxu0 %v358
    %511 = vmatpush1.msra.mxu0 %v357
    %512 = vmatprep.subr.mxu0 %v360
    %513 = vmatpush1.msra.mxu0 %v359
    %514 = vmatprep.subr.mxu0 %v362
    %515 = vmatpush1.msra.mxu0 %v361
    %516 = vmatprep.subr.mxu0 %v364
    %517 = vmatpush1.msra.mxu0 %v363
    %518 = vmatprep.subr.mxu0 %v366
    %519 = vmatpush1.msra.mxu0 %v365
    %520 = vmatprep.subr.mxu0 %v368
    %521 = vmatpush1.msra.mxu0 %v367
    %522 = vmatprep.subr.mxu0 %v370
    %523 = vmatpush1.msra.mxu0 %v369
    %524 = vmatprep.subr.mxu0 %v372
    %525 = vmatpush1.msra.mxu0 %v371
    %526 = vmatprep.subr.mxu0 %v374
    %527 = vmatpush1.msra.mxu0 %v373
    %528 = vmatprep.subr.mxu0 %v376
    %529 = vmatpush1.msra.mxu0 %v375
    %530 = vmatprep.subr.mxu0 %v378
    %531 = vmatpush1.msra.mxu0 %v377
    %532 = vmatprep.mubr.f32.mxu0 %v231
    %533 = vmatmul.mubr.f32.gmra.mrb[0].mxu0 %v229
    %v534 = vpop.f32.mrb[0].mxu0
    %v535 = vadd.f32 0.0, %v534
    %v536 = vpop.f32.mrb[0].mxu0
    %v537 = vadd.f32 0.0, %v536
    %538 = vmatprep.mubr.f32.mxu0 %v237
    %539 = vmatmul.mubr.f32.gmra.mrb[0].mxu0 %v235
    %v540 = vpop.f32.mrb[0].mxu0
    %v541 = vadd.f32 0.0, %v540
    %v542 = vpop.f32.mrb[0].mxu0
    %v543 = vadd.f32 0.0, %v542
    %544 = vmatprep.mubr.f32.mxu0 %v243
    %545 = vmatmul.mubr.f32.gmra.mrb[0].mxu0 %v241
    %v546 = vpop.f32.mrb[0].mxu0
    %v547 = vadd.f32 0.0, %v546
    %v548 = vpop.f32.mrb[0].mxu0
    %v549 = vadd.f32 0.0, %v548
    %550 = vmatprep.mubr.f32.mxu0 %v249
    %551 = vmatmul.mubr.f32.gmra.mrb[0].mxu0 %v247
    %v552 = vpop.f32.mrb[0].mxu0
    %v553 = vadd.f32 0.0, %v552
    %v554 = vpop.f32.mrb[0].mxu0
    %v555 = vadd.f32 0.0, %v554
    %556 = vdwg.mxu0
    %v557 = vsub.f32 %v446, %v535
    %v558 = vsub.f32 %v448, %v537
    %v559 = vsub.f32 %v452, %v541
    %v560 = vsub.f32 %v454, %v543
    %v561 = vsub.f32 %v458, %v547
    %v562 = vsub.f32 %v460, %v549
    %v563 = vsub.f32 %v464, %v553
    %v564 = vsub.f32 %v466, %v555
    %565 = vmatprep.subr.mxu0 %v252
    %566 = vmatpush1.msra.mxu0 %v251
    %567 = vmatprep.subr.mxu0 %v254
    %568 = vmatpush1.msra.mxu0 %v253
    %569 = vmatprep.subr.mxu0 %v256
    %570 = vmatpush1.msra.mxu0 %v255
    %571 = vmatprep.subr.mxu0 %v258
    %572 = vmatpush1.msra.mxu0 %v257
    %573 = vmatprep.subr.mxu0 %v260
    %574 = vmatpush1.msra.mxu0 %v259
    %575 = vmatprep.subr.mxu0 %v262
    %576 = vmatpush1.msra.mxu0 %v261
    %577 = vmatprep.subr.mxu0 %v264
    %578 = vmatpush1.msra.mxu0 %v263
    %579 = vmatprep.subr.mxu0 %v266
    %580 = vmatpush1.msra.mxu0 %v265
    %581 = vmatprep.subr.mxu0 %v268
    %582 = vmatpush1.msra.mxu0 %v267
    %583 = vmatprep.subr.mxu0 %v270
    %584 = vmatpush1.msra.mxu0 %v269
    %585 = vmatprep.subr.mxu0 %v272
    %586 = vmatpush1.msra.mxu0 %v271
    %587 = vmatprep.subr.mxu0 %v274
    %588 = vmatpush1.msra.mxu0 %v273
    %589 = vmatprep.subr.mxu0 %v276
    %590 = vmatpush1.msra.mxu0 %v275
    %591 = vmatprep.subr.mxu0 %v278
    %592 = vmatpush1.msra.mxu0 %v277
    %593 = vmatprep.subr.mxu0 %v280
    %594 = vmatpush1.msra.mxu0 %v279
    %595 = vmatprep.subr.mxu0 %v282
    %596 = vmatpush1.msra.mxu0 %v281
    %597 = vmatprep.subr.mxu0 %v284
    %598 = vmatpush1.msra.mxu0 %v283
    %599 = vmatprep.subr.mxu0 %v286
    %600 = vmatpush1.msra.mxu0 %v285
    %601 = vmatprep.subr.mxu0 %v288
    %602 = vmatpush1.msra.mxu0 %v287
    %603 = vmatprep.subr.mxu0 %v290
    %604 = vmatpush1.msra.mxu0 %v289
    %605 = vmatprep.subr.mxu0 %v292
    %606 = vmatpush1.msra.mxu0 %v291
    %607 = vmatprep.subr.mxu0 %v294
    %608 = vmatpush1.msra.mxu0 %v293
    %609 = vmatprep.subr.mxu0 %v296
    %610 = vmatpush1.msra.mxu0 %v295
    %611 = vmatprep.subr.mxu0 %v298
    %612 = vmatpush1.msra.mxu0 %v297
    %613 = vmatprep.subr.mxu0 %v300
    %614 = vmatpush1.msra.mxu0 %v299
    %615 = vmatprep.subr.mxu0 %v302
    %616 = vmatpush1.msra.mxu0 %v301
    %617 = vmatprep.subr.mxu0 %v304
    %618 = vmatpush1.msra.mxu0 %v303
    %619 = vmatprep.subr.mxu0 %v306
    %620 = vmatpush1.msra.mxu0 %v305
    %621 = vmatprep.subr.mxu0 %v308
    %622 = vmatpush1.msra.mxu0 %v307
    %623 = vmatprep.subr.mxu0 %v310
    %624 = vmatpush1.msra.mxu0 %v309
    %625 = vmatprep.subr.mxu0 %v312
    %626 = vmatpush1.msra.mxu0 %v311
    %627 = vmatprep.subr.mxu0 %v314
    %628 = vmatpush1.msra.mxu0 %v313
    %629 = vmatprep.mubr.f32.mxu0 %v231
    %630 = vmatmul.mubr.f32.gmra.mrb[0].mxu0 %v229
    %v631 = vpop.f32.mrb[0].mxu0
    %v632 = vadd.f32 0.0, %v631
    %v633 = vpop.f32.mrb[0].mxu0
    %v634 = vadd.f32 0.0, %v633
    %635 = vmatprep.mubr.f32.mxu0 %v237
    %636 = vmatmul.mubr.f32.gmra.mrb[0].mxu0 %v235
    %v637 = vpop.f32.mrb[0].mxu0
    %v638 = vadd.f32 0.0, %v637
    %v639 = vpop.f32.mrb[0].mxu0
    %v640 = vadd.f32 0.0, %v639
    %641 = vmatprep.mubr.f32.mxu0 %v243
    %642 = vmatmul.mubr.f32.gmra.mrb[0].mxu0 %v241
    %v643 = vpop.f32.mrb[0].mxu0
    %v644 = vadd.f32 0.0, %v643
    %v645 = vpop.f32.mrb[0].mxu0
    %v646 = vadd.f32 0.0, %v645
    %647 = vmatprep.mubr.f32.mxu0 %v249
    %648 = vmatmul.mubr.f32.gmra.mrb[0].mxu0 %v247
    %v649 = vpop.f32.mrb[0].mxu0
    %v650 = vadd.f32 0.0, %v649
    %v651 = vpop.f32.mrb[0].mxu0
    %v652 = vadd.f32 0.0, %v651
    %653 = vdwg.mxu0
    %654 = vmatprep.subr.mxu0 %v316
    %655 = vmatpush1.msra.mxu0 %v315
    %656 = vmatprep.subr.mxu0 %v318
    %657 = vmatpush1.msra.mxu0 %v317
    %658 = vmatprep.subr.mxu0 %v320
    %659 = vmatpush1.msra.mxu0 %v319
    %660 = vmatprep.subr.mxu0 %v322
    %661 = vmatpush1.msra.mxu0 %v321
    %662 = vmatprep.subr.mxu0 %v324
    %663 = vmatpush1.msra.mxu0 %v323
    %664 = vmatprep.subr.mxu0 %v326
    %665 = vmatpush1.msra.mxu0 %v325
    %666 = vmatprep.subr.mxu0 %v328
    %667 = vmatpush1.msra.mxu0 %v327
    %668 = vmatprep.subr.mxu0 %v330
    %669 = vmatpush1.msra.mxu0 %v329
    %670 = vmatprep.subr.mxu0 %v332
    %671 = vmatpush1.msra.mxu0 %v331
    %672 = vmatprep.subr.mxu0 %v334
    %673 = vmatpush1.msra.mxu0 %v333
    %674 = vmatprep.subr.mxu0 %v336
    %675 = vmatpush1.msra.mxu0 %v335
    %676 = vmatprep.subr.mxu0 %v338
    %677 = vmatpush1.msra.mxu0 %v337
    %678 = vmatprep.subr.mxu0 %v340
    %679 = vmatpush1.msra.mxu0 %v339
    %680 = vmatprep.subr.mxu0 %v342
    %681 = vmatpush1.msra.mxu0 %v341
    %682 = vmatprep.subr.mxu0 %v344
    %683 = vmatpush1.msra.mxu0 %v343
    %684 = vmatprep.subr.mxu0 %v346
    %685 = vmatpush1.msra.mxu0 %v345
    %686 = vmatprep.subr.mxu0 %v348
    %687 = vmatpush1.msra.mxu0 %v347
    %688 = vmatprep.subr.mxu0 %v350
    %689 = vmatpush1.msra.mxu0 %v349
    %690 = vmatprep.subr.mxu0 %v352
    %691 = vmatpush1.msra.mxu0 %v351
    %692 = vmatprep.subr.mxu0 %v354
    %693 = vmatpush1.msra.mxu0 %v353
    %694 = vmatprep.subr.mxu0 %v356
    %695 = vmatpush1.msra.mxu0 %v355
    %696 = vmatprep.subr.mxu0 %v358
    %697 = vmatpush1.msra.mxu0 %v357
    %698 = vmatprep.subr.mxu0 %v360
    %699 = vmatpush1.msra.mxu0 %v359
    %700 = vmatprep.subr.mxu0 %v362
    %701 = vmatpush1.msra.mxu0 %v361
    %702 = vmatprep.subr.mxu0 %v364
    %703 = vmatpush1.msra.mxu0 %v363
    %704 = vmatprep.subr.mxu0 %v366
    %705 = vmatpush1.msra.mxu0 %v365
    %706 = vmatprep.subr.mxu0 %v368
    %707 = vmatpush1.msra.mxu0 %v367
    %708 = vmatprep.subr.mxu0 %v370
    %709 = vmatpush1.msra.mxu0 %v369
    %710 = vmatprep.subr.mxu0 %v372
    %711 = vmatpush1.msra.mxu0 %v371
    %712 = vmatprep.subr.mxu0 %v374
    %713 = vmatpush1.msra.mxu0 %v373
    %714 = vmatprep.subr.mxu0 %v376
    %715 = vmatpush1.msra.mxu0 %v375
    %716 = vmatprep.subr.mxu0 %v378
    %717 = vmatpush1.msra.mxu0 %v377
    %718 = vmatprep.mubr.f32.mxu0 %v207
    %719 = vmatmul.mubr.f32.gmra.mrb[0].mxu0 %v205
    %v720 = vpop.f32.mrb[0].mxu0
    %v721 = vadd.f32 %v632, %v720
    %v722 = vpop.f32.mrb[0].mxu0
    %v723 = vadd.f32 %v634, %v722
    %724 = vmatprep.mubr.f32.mxu0 %v213
    %725 = vmatmul.mubr.f32.gmra.mrb[0].mxu0 %v211
    %v726 = vpop.f32.mrb[0].mxu0
    %v727 = vadd.f32 %v638, %v726
    %v728 = vpop.f32.mrb[0].mxu0
    %v729 = vadd.f32 %v640, %v728
    %730 = vmatprep.mubr.f32.mxu0 %v219
    %731 = vmatmul.mubr.f32.gmra.mrb[0].mxu0 %v217
    %v732 = vpop.f32.mrb[0].mxu0
    %v733 = vadd.f32 %v644, %v732
    %v734 = vpop.f32.mrb[0].mxu0
    %v735 = vadd.f32 %v646, %v734
    %736 = vmatprep.mubr.f32.mxu0 %v225
    %737 = vmatmul.mubr.f32.gmra.mrb[0].mxu0 %v223
    %v738 = vpop.f32.mrb[0].mxu0
    %v739 = vadd.f32 %v650, %v738
    %v740 = vpop.f32.mrb[0].mxu0
    %v741 = vadd.f32 %v652, %v740
    %742 = vdwg.mxu0
    %v743 = vld [vmem:[#allocation5] sm:$0xff]
    %v744 = vld [vmem:[#allocation5 + $0x8] sm:$0xff]
    %v745 = vld [vmem:[#allocation5 + $0x10] sm:$0xff]
    %v746 = vld [vmem:[#allocation5 + $0x18] sm:$0xff]
    %v747 = vld [vmem:[#allocation5 + $0x20] sm:$0xff]
    %v748 = vld [vmem:[#allocation5 + $0x28] sm:$0xff]
    %v749 = vld [vmem:[#allocation5 + $0x30] sm:$0xff]
    %v750 = vld [vmem:[#allocation5 + $0x38] sm:$0xff]
    %v751 = vld [vmem:[#allocation5 + $0x40] sm:$0xff]
    %v752 = vld [vmem:[#allocation5 + $0x48] sm:$0xff]
    %v753 = vld [vmem:[#allocation5 + $0x50] sm:$0xff]
    %v754 = vld [vmem:[#allocation5 + $0x58] sm:$0xff]
    %v755 = vld [vmem:[#allocation5 + $0x60] sm:$0xff]
    %v756 = vld [vmem:[#allocation5 + $0x68] sm:$0xff]
    %v757 = vld [vmem:[#allocation5 + $0x70] sm:$0xff]
    %v758 = vld [vmem:[#allocation5 + $0x78] sm:$0xff]
    %v759 = vmul.f32 %v557, %v743
    %v760 = vmul.f32 %v558, %v744
    %v761 = vmul.f32 %v559, %v745
    %v762 = vmul.f32 %v560, %v746
    %v763 = vmul.f32 %v561, %v747
    %v764 = vmul.f32 %v562, %v748
    %v765 = vmul.f32 %v563, %v749
    %v766 = vmul.f32 %v564, %v750
    %v767 = vmul.f32 %v721, %v751
    %v768 = vmul.f32 %v723, %v752
    %v769 = vmul.f32 %v727, %v753
    %v770 = vmul.f32 %v729, %v754
    %v771 = vmul.f32 %v733, %v755
    %v772 = vmul.f32 %v735, %v756
    %v773 = vmul.f32 %v739, %v757
    %v774 = vmul.f32 %v741, %v758
    %v775 = vadd.f32 %v759, %v767
    %v776 = vadd.f32 %v760, %v768
    %v777 = vadd.f32 %v761, %v769
    %v778 = vadd.f32 %v762, %v770
    %v779 = vadd.f32 %v763, %v771
    %v780 = vadd.f32 %v764, %v772
    %v781 = vadd.f32 %v765, %v773
    %v782 = vadd.f32 %v766, %v774
    %v783 = vmul.f32 %v721, %v743
    %v784 = vmul.f32 %v723, %v744
    %v785 = vmul.f32 %v727, %v745
    %v786 = vmul.f32 %v729, %v746
    %v787 = vmul.f32 %v733, %v747
    %v788 = vmul.f32 %v735, %v748
    %v789 = vmul.f32 %v739, %v749
    %v790 = vmul.f32 %v741, %v750
    %v791 = vmul.f32 %v557, %v751
    %v792 = vmul.f32 %v558, %v752
    %v793 = vmul.f32 %v559, %v753
    %v794 = vmul.f32 %v560, %v754
    %v795 = vmul.f32 %v561, %v755
    %v796 = vmul.f32 %v562, %v756
    %v797 = vmul.f32 %v563, %v757
    %v798 = vmul.f32 %v564, %v758
    %v799 = vsub.f32 %v783, %v791
    %v800 = vsub.f32 %v784, %v792
    %v801 = vsub.f32 %v785, %v793
    %v802 = vsub.f32 %v786, %v794
    %v803 = vsub.f32 %v787, %v795
    %v804 = vsub.f32 %v788, %v796
    %v805 = vsub.f32 %v789, %v797
    %v806 = vsub.f32 %v790, %v798
    %v807 = vld [vmem:[#allocation10] sm:$0xff]
    %v808 = vld [vmem:[#allocation10 + $0x10] sm:$0xff]
    %v809 = vld [vmem:[#allocation10 + $0x20] sm:$0xff]
    %v810 = vld [vmem:[#allocation10 + $0x30] sm:$0xff]
    %v811 = vld [vmem:[#allocation10 + $0x40] sm:$0xff]
    %v812 = vld [vmem:[#allocation10 + $0x50] sm:$0xff]
    %v813 = vld [vmem:[#allocation10 + $0x60] sm:$0xff]
    %v814 = vld [vmem:[#allocation10 + $0x70] sm:$0xff]
    %v815 = vld [vmem:[#allocation10 + $0x80] sm:$0xff]
    %v816 = vld [vmem:[#allocation10 + $0x90] sm:$0xff]
    %v817 = vld [vmem:[#allocation10 + $0xa0] sm:$0xff]
    %v818 = vld [vmem:[#allocation10 + $0xb0] sm:$0xff]
    %v819 = vld [vmem:[#allocation10 + $0xc0] sm:$0xff]
    %v820 = vld [vmem:[#allocation10 + $0xd0] sm:$0xff]
    %v821 = vld [vmem:[#allocation10 + $0xe0] sm:$0xff]
    %v822 = vld [vmem:[#allocation10 + $0xf0] sm:$0xff]
    %v823 = vld [vmem:[#allocation10 + $0x100] sm:$0xff]
    %v824 = vld [vmem:[#allocation10 + $0x110] sm:$0xff]
    %v825 = vld [vmem:[#allocation10 + $0x120] sm:$0xff]
    %v826 = vld [vmem:[#allocation10 + $0x130] sm:$0xff]
    %v827 = vld [vmem:[#allocation10 + $0x140] sm:$0xff]
    %v828 = vld [vmem:[#allocation10 + $0x150] sm:$0xff]
    %v829 = vld [vmem:[#allocation10 + $0x160] sm:$0xff]
    %v830 = vld [vmem:[#allocation10 + $0x170] sm:$0xff]
    %v831 = vld [vmem:[#allocation10 + $0x180] sm:$0xff]
    %v832 = vld [vmem:[#allocation10 + $0x190] sm:$0xff]
    %v833 = vld [vmem:[#allocation10 + $0x1a0] sm:$0xff]
    %v834 = vld [vmem:[#allocation10 + $0x1b0] sm:$0xff]
    %v835 = vld [vmem:[#allocation10 + $0x1c0] sm:$0xff]
    %v836 = vld [vmem:[#allocation10 + $0x1d0] sm:$0xff]
    %v837 = vld [vmem:[#allocation10 + $0x1e0] sm:$0xff]
    %v838 = vld [vmem:[#allocation10 + $0x1f0] sm:$0xff]
    %v839 = vld [vmem:[#allocation10 + $0x8] sm:$0xff]
    %v840 = vld [vmem:[#allocation10 + $0x18] sm:$0xff]
    %v841 = vld [vmem:[#allocation10 + $0x28] sm:$0xff]
    %v842 = vld [vmem:[#allocation10 + $0x38] sm:$0xff]
    %v843 = vld [vmem:[#allocation10 + $0x48] sm:$0xff]
    %v844 = vld [vmem:[#allocation10 + $0x58] sm:$0xff]
    %v845 = vld [vmem:[#allocation10 + $0x68] sm:$0xff]
    %v846 = vld [vmem:[#allocation10 + $0x78] sm:$0xff]
    %v847 = vld [vmem:[#allocation10 + $0x88] sm:$0xff]
    %v848 = vld [vmem:[#allocation10 + $0x98] sm:$0xff]
    %v849 = vld [vmem:[#allocation10 + $0xa8] sm:$0xff]
    %v850 = vld [vmem:[#allocation10 + $0xb8] sm:$0xff]
    %v851 = vld [vmem:[#allocation10 + $0xc8] sm:$0xff]
    %v852 = vld [vmem:[#allocation10 + $0xd8] sm:$0xff]
    %v853 = vld [vmem:[#allocation10 + $0xe8] sm:$0xff]
    %v854 = vld [vmem:[#allocation10 + $0xf8] sm:$0xff]
    %v855 = vld [vmem:[#allocation10 + $0x108] sm:$0xff]
    %v856 = vld [vmem:[#allocation10 + $0x118] sm:$0xff]
    %v857 = vld [vmem:[#allocation10 + $0x128] sm:$0xff]
    %v858 = vld [vmem:[#allocation10 + $0x138] sm:$0xff]
    %v859 = vld [vmem:[#allocation10 + $0x148] sm:$0xff]
    %v860 = vld [vmem:[#allocation10 + $0x158] sm:$0xff]
    %v861 = vld [vmem:[#allocation10 + $0x168] sm:$0xff]
    %v862 = vld [vmem:[#allocation10 + $0x178] sm:$0xff]
    %v863 = vld [vmem:[#allocation10 + $0x188] sm:$0xff]
    %v864 = vld [vmem:[#allocation10 + $0x198] sm:$0xff]
    %v865 = vld [vmem:[#allocation10 + $0x1a8] sm:$0xff]
    %v866 = vld [vmem:[#allocation10 + $0x1b8] sm:$0xff]
    %v867 = vld [vmem:[#allocation10 + $0x1c8] sm:$0xff]
    %v868 = vld [vmem:[#allocation10 + $0x1d8] sm:$0xff]
    %v869 = vld [vmem:[#allocation10 + $0x1e8] sm:$0xff]
    %v870 = vld [vmem:[#allocation10 + $0x1f8] sm:$0xff]
    %871 = vmatprep.subr.mxu0 0.0
    %872 = vmatpush1.msra.mxu0 %v839
    %873 = vmatprep.subr.mxu0 0.0
    %874 = vmatpush1.msra.mxu0 %v840
    %875 = vmatprep.subr.mxu0 0.0
    %876 = vmatpush1.msra.mxu0 %v841
    %877 = vmatprep.subr.mxu0 0.0
    %878 = vmatpush1.msra.mxu0 %v842
    %879 = vmatprep.subr.mxu0 0.0
    %880 = vmatpush1.msra.mxu0 %v843
    %881 = vmatprep.subr.mxu0 0.0
    %882 = vmatpush1.msra.mxu0 %v844
    %883 = vmatprep.subr.mxu0 0.0
    %884 = vmatpush1.msra.mxu0 %v845
    %885 = vmatprep.subr.mxu0 0.0
    %886 = vmatpush1.msra.mxu0 %v846
    %887 = vmatprep.subr.mxu0 0.0
    %888 = vmatpush1.msra.mxu0 %v847
    %889 = vmatprep.subr.mxu0 0.0
    %890 = vmatpush1.msra.mxu0 %v848
    %891 = vmatprep.subr.mxu0 0.0
    %892 = vmatpush1.msra.mxu0 %v849
    %893 = vmatprep.subr.mxu0 0.0
    %894 = vmatpush1.msra.mxu0 %v850
    %895 = vmatprep.subr.mxu0 0.0
    %896 = vmatpush1.msra.mxu0 %v851
    %897 = vmatprep.subr.mxu0 0.0
    %898 = vmatpush1.msra.mxu0 %v852
    %899 = vmatprep.subr.mxu0 0.0
    %900 = vmatpush1.msra.mxu0 %v853
    %901 = vmatprep.subr.mxu0 0.0
    %902 = vmatpush1.msra.mxu0 %v854
    %903 = vmatprep.subr.mxu0 0.0
    %904 = vmatpush1.msra.mxu0 %v855
    %905 = vmatprep.subr.mxu0 0.0
    %906 = vmatpush1.msra.mxu0 %v856
    %907 = vmatprep.subr.mxu0 0.0
    %908 = vmatpush1.msra.mxu0 %v857
    %909 = vmatprep.subr.mxu0 0.0
    %910 = vmatpush1.msra.mxu0 %v858
    %911 = vmatprep.subr.mxu0 0.0
    %912 = vmatpush1.msra.mxu0 %v859
    %913 = vmatprep.subr.mxu0 0.0
    %914 = vmatpush1.msra.mxu0 %v860
    %915 = vmatprep.subr.mxu0 0.0
    %916 = vmatpush1.msra.mxu0 %v861
    %917 = vmatprep.subr.mxu0 0.0
    %918 = vmatpush1.msra.mxu0 %v862
    %919 = vmatprep.subr.mxu0 0.0
    %920 = vmatpush1.msra.mxu0 %v863
    %921 = vmatprep.subr.mxu0 0.0
    %922 = vmatpush1.msra.mxu0 %v864
    %923 = vmatprep.subr.mxu0 0.0
    %924 = vmatpush1.msra.mxu0 %v865
    %925 = vmatprep.subr.mxu0 0.0
    %926 = vmatpush1.msra.mxu0 %v866
    %927 = vmatprep.subr.mxu0 0.0
    %928 = vmatpush1.msra.mxu0 %v867
    %929 = vmatprep.subr.mxu0 0.0
    %930 = vmatpush1.msra.mxu0 %v868
    %931 = vmatprep.subr.mxu0 0.0
    %932 = vmatpush1.msra.mxu0 %v869
    %933 = vmatprep.subr.mxu0 0.0
    %934 = vmatpush1.msra.mxu0 %v870
    %935 = vmatprep.mubr.f32.mxu0 %v800
    %936 = vmatmul.mubr.f32.gmra.mrb[0].mxu0 %v799
    %v937 = vpop.f32.mrb[0].mxu0
    %v938 = vadd.f32 0.0, %v937
    %v939 = vpop.f32.mrb[0].mxu0
    %940 = vmatprep.mubr.f32.mxu0 %v802
    %941 = vmatmul.mubr.f32.gmra.mrb[0].mxu0 %v801
    %v942 = vpop.f32.mrb[0].mxu0
    %v943 = vadd.f32 0.0, %v942
    %v944 = vpop.f32.mrb[0].mxu0
    %945 = vmatprep.mubr.f32.mxu0 %v804
    %946 = vmatmul.mubr.f32.gmra.mrb[0].mxu0 %v803
    %v947 = vpop.f32.mrb[0].mxu0
    %v948 = vadd.f32 0.0, %v947
    %v949 = vpop.f32.mrb[0].mxu0
    %950 = vmatprep.mubr.f32.mxu0 %v806
    %951 = vmatmul.mubr.f32.gmra.mrb[0].mxu0 %v805
    %v952 = vpop.f32.mrb[0].mxu0
    %v953 = vadd.f32 0.0, %v952
    %v954 = vpop.f32.mrb[0].mxu0
    %955 = vdwg.mxu0
    %956 = vmatprep.subr.mxu0 0.0
    %957 = vmatpush1.msra.mxu0 %v807
    %958 = vmatprep.subr.mxu0 0.0
    %959 = vmatpush1.msra.mxu0 %v808
    %960 = vmatprep.subr.mxu0 0.0
    %961 = vmatpush1.msra.mxu0 %v809
    %962 = vmatprep.subr.mxu0 0.0
    %963 = vmatpush1.msra.mxu0 %v810
    %964 = vmatprep.subr.mxu0 0.0
    %965 = vmatpush1.msra.mxu0 %v811
    %966 = vmatprep.subr.mxu0 0.0
    %967 = vmatpush1.msra.mxu0 %v812
    %968 = vmatprep.subr.mxu0 0.0
    %969 = vmatpush1.msra.mxu0 %v813
    %970 = vmatprep.subr.mxu0 0.0
    %971 = vmatpush1.msra.mxu0 %v814
    %972 = vmatprep.subr.mxu0 0.0
    %973 = vmatpush1.msra.mxu0 %v815
    %974 = vmatprep.subr.mxu0 0.0
    %975 = vmatpush1.msra.mxu0 %v816
    %976 = vmatprep.subr.mxu0 0.0
    %977 = vmatpush1.msra.mxu0 %v817
    %978 = vmatprep.subr.mxu0 0.0
    %979 = vmatpush1.msra.mxu0 %v818
    %980 = vmatprep.subr.mxu0 0.0
    %981 = vmatpush1.msra.mxu0 %v819
    %982 = vmatprep.subr.mxu0 0.0
    %983 = vmatpush1.msra.mxu0 %v820
    %984 = vmatprep.subr.mxu0 0.0
    %985 = vmatpush1.msra.mxu0 %v821
    %986 = vmatprep.subr.mxu0 0.0
    %987 = vmatpush1.msra.mxu0 %v822
    %988 = vmatprep.subr.mxu0 0.0
    %989 = vmatpush1.msra.mxu0 %v823
    %990 = vmatprep.subr.mxu0 0.0
    %991 = vmatpush1.msra.mxu0 %v824
    %992 = vmatprep.subr.mxu0 0.0
    %993 = vmatpush1.msra.mxu0 %v825
    %994 = vmatprep.subr.mxu0 0.0
    %995 = vmatpush1.msra.mxu0 %v826
    %996 = vmatprep.subr.mxu0 0.0
    %997 = vmatpush1.msra.mxu0 %v827
    %998 = vmatprep.subr.mxu0 0.0
    %999 = vmatpush1.msra.mxu0 %v828
    %1000 = vmatprep.subr.mxu0 0.0
    %1001 = vmatpush1.msra.mxu0 %v829
    %1002 = vmatprep.subr.mxu0 0.0
    %1003 = vmatpush1.msra.mxu0 %v830
    %1004 = vmatprep.subr.mxu0 0.0
    %1005 = vmatpush1.msra.mxu0 %v831
    %1006 = vmatprep.subr.mxu0 0.0
    %1007 = vmatpush1.msra.mxu0 %v832
    %1008 = vmatprep.subr.mxu0 0.0
    %1009 = vmatpush1.msra.mxu0 %v833
    %1010 = vmatprep.subr.mxu0 0.0
    %1011 = vmatpush1.msra.mxu0 %v834
    %1012 = vmatprep.subr.mxu0 0.0
    %1013 = vmatpush1.msra.mxu0 %v835
    %1014 = vmatprep.subr.mxu0 0.0
    %1015 = vmatpush1.msra.mxu0 %v836
    %1016 = vmatprep.subr.mxu0 0.0
    %1017 = vmatpush1.msra.mxu0 %v837
    %1018 = vmatprep.subr.mxu0 0.0
    %1019 = vmatpush1.msra.mxu0 %v838
    %1020 = vmatprep.mubr.f32.mxu0 %v776
    %1021 = vmatmul.mubr.f32.gmra.mrb[0].mxu0 %v775
    %v1022 = vpop.f32.mrb[0].mxu0
    %v1023 = vadd.f32 %v938, %v1022
    %v1024 = vpop.f32.mrb[0].mxu0
    %1025 = vmatprep.mubr.f32.mxu0 %v778
    %1026 = vmatmul.mubr.f32.gmra.mrb[0].mxu0 %v777
    %v1027 = vpop.f32.mrb[0].mxu0
    %v1028 = vadd.f32 %v943, %v1027
    %v1029 = vpop.f32.mrb[0].mxu0
    %1030 = vmatprep.mubr.f32.mxu0 %v780
    %1031 = vmatmul.mubr.f32.gmra.mrb[0].mxu0 %v779
    %v1032 = vpop.f32.mrb[0].mxu0
    %v1033 = vadd.f32 %v948, %v1032
    %v1034 = vpop.f32.mrb[0].mxu0
    %1035 = vmatprep.mubr.f32.mxu0 %v782
    %1036 = vmatmul.mubr.f32.gmra.mrb[0].mxu0 %v781
    %v1037 = vpop.f32.mrb[0].mxu0
    %v1038 = vadd.f32 %v953, %v1037
    %v1039 = vpop.f32.mrb[0].mxu0
    %1040 = vdwg.mxu0
    %1041 = vst [vmem:[#allocation11] sm:$0xff] %v1023
    %1042 = vst [vmem:[#allocation11 + $0x8] sm:$0xff] %v1028
    %1043 = vst [vmem:[#allocation11 + $0x10] sm:$0xff] %v1033
    %1044 = vst [vmem:[#allocation11 + $0x18] sm:$0xff] %v1038
    // Predicated region
    $region42: #{tpu_custom_call.1} parent=1 // pred_check
      _
    $region43: #{tpu_custom_call.1} parent=1 // pred_check_branch
      %1046 = sbr.rel (0) target = $region45
    $region44: #{tpu_custom_call.1} parent=1 // pred_region
      %s1048 = ssub.s32 512, 512
      %1049 = vsyncadd [#allocation4], %s1048
      %s1050 = sshll.u32 [#allocation11], 4
      %s1051 = int_to_ptr.vmem [resolvable:$true] %s1050
      %1056 = dma.vmem_to_hbm [thread:$0]  %s1051, 512, %s5, [#allocation4], 128, 128, 8
    $region45: #{tpu_custom_call.1} parent=1 // pred_fallthru
      _
    // Predicated region
    $region46: #{tpu_custom_call.1} parent=1 // pred_check
      _
    $region47: #{tpu_custom_call.1} parent=1 // pred_check_branch
      %1058 = sbr.rel (0) target = $region49
    $region48: #{tpu_custom_call.1} parent=1 // pred_region
      %1059 = dma.done [#allocation4], 512
    $region49: #{tpu_custom_call.1} parent=1 // pred_fallthru
      _
    %1060 = vsyncpa [#allocation3], 1
    %1061 = vsyncpa [#allocation6], 1
    %1062 = vsyncpa [#allocation9], 1
    %1063 = vsyncpa [#allocation4], 1

</llo_original>
